<compile_context>
chip_gen: v7x
topology: tpu7x:2x2x1
jax: 0.10.0
libtpu: 0.0.40
codegen_flags: <defaults>
</compile_context>

<pallas_src>
import jax
import jax.numpy as jnp
from jax.experimental import pallas as pl
from jax.experimental.pallas import tpu as pltpu


def _net_kernel(x_ref, w_ref, b_ref, out_ref):
    """One batch tile: fused (fc_w | fc_b) linear + negative squared norm."""
    n_dim = w_ref.shape[0]
    x = x_ref[...]                       # [tile_b, n_dim]
    wcat = w_ref[...]                    # [n_dim, 2*n_dim]  (fc_w cols | fc_b cols)

    # Bias folded into accumulator init (added once, hoisted out of the MACs).
    acc = jnp.broadcast_to(b_ref[...], (x.shape[0], 2 * n_dim)).astype(jnp.float32)

    # K = n_dim is tiny -> VPU broadcast-MACs (outer products) instead of MXU.
    for k in range(n_dim):               # unrolled at trace time (n_dim small)
        acc = acc + x[:, k:k + 1] * wcat[k:k + 1, :]

    w_out = acc[:, :n_dim]               # fc_w(x)
    b_lin = acc[:, n_dim:]               # fc_b(x)
    b_out = -jnp.sum(b_lin * b_lin, axis=1, keepdims=True)   # -||fc_b(x)||^2

    # Single fused output slab: [:, :n_dim] = w, [:, n_dim] = b.
    out_ref[:, 0:n_dim] = w_out
    out_ref[:, n_dim:n_dim + 1] = b_out


def net_forward(x, params):
    """Forward pass of Net.

    x:      [B, n_dim] float32
    params: dict with ww [n_dim, n_dim], bw [1, n_dim], wb [n_dim, n_dim],
            bb [1, n_dim]  (Linear weights stored transposed: [in, out]).
    returns (w, b) with shapes [B, n_dim] and [B].
    """
    x = x.astype(jnp.float32)
    B, n_dim = x.shape

    # Fuse both heads into one weight/bias (halves matmul + output traffic).
    wcat = jnp.concatenate([params["ww"], params["wb"]], axis=1)   # [n_dim, 2*n_dim]
    bcat = jnp.concatenate([params["bw"], params["bb"]], axis=1)   # [1, 2*n_dim]

    # Batch tile: multiple of 8 sublanes, capped at 512 rows per grid step.
    tile_b = min(512, pl.cdiv(B, 8) * 8)
    b_pad = pl.cdiv(B, tile_b) * tile_b
    if b_pad != B:
        x = jnp.pad(x, ((0, b_pad - B), (0, 0)))

    out = pl.pallas_call(
        _net_kernel,
        out_shape=jax.ShapeDtypeStruct((b_pad, n_dim + 1), jnp.float32),
        grid=(b_pad // tile_b,),
        in_specs=[
            # x: one batch tile per grid step.
            pl.BlockSpec((tile_b, n_dim), lambda i: (i, 0)),
            # Fused weight / bias: constant index_map -> VMEM-resident across steps.
            pl.BlockSpec((n_dim, 2 * n_dim), lambda i: (0, 0)),
            pl.BlockSpec((1, 2 * n_dim), lambda i: (0, 0)),
        ],
        out_specs=pl.BlockSpec((tile_b, n_dim + 1), lambda i: (i, 0)),
        compiler_params=pltpu.CompilerParams(
            dimension_semantics=("parallel",)),   # shards batch across v7x's 2 TCs
    )(x, wcat, bcat)

    w = out[:B, :n_dim]
    b = out[:B, n_dim]           # [B], matches torch.sum(b * b, 1) (no keepdim)
    return w, b


def init_params(key, n_dim=2):
    """Deterministic synthetic params (PyTorch Linear shapes, transposed)."""
    ks = jax.random.split(key, 4)

    def lin(kw, kb, fan_in, fan_out):
        # Mimic torch's default U(-1/sqrt(fan_in), 1/sqrt(fan_in)) init.
        bound = 1.0 / jnp.sqrt(jnp.float32(fan_in))
        w = jax.random.uniform(kw, (fan_in, fan_out), jnp.float32, -bound, bound)
        b = jax.random.uniform(kb, (1, fan_out), jnp.float32, -bound, bound)
        return w, b

    ww, bw = lin(ks[0], ks[1], n_dim, n_dim)   # fc_w: Linear(n_dim, n_dim)
    wb, bb = lin(ks[2], ks[3], n_dim, n_dim)   # fc_b: Linear(n_dim, n_dim)
    return dict(ww=ww, bw=bw, wb=wb, bb=bb)


def _reference(x, p):
    w = x @ p["ww"] + p["bw"]
    bl = x @ p["wb"] + p["bb"]
    return w, -jnp.sum(bl * bl, axis=1)


if __name__ == "__main__":
    key = jax.random.PRNGKey(0)
    k_param, k_x = jax.random.split(key)

    n_dim, batch = 2, 8
    params = init_params(k_param, n_dim=n_dim)
    x = jax.random.normal(k_x, (batch, n_dim), jnp.float32)

    w_out, b_out = net_forward(x, params)
    w_out = jax.block_until_ready(w_out)
    b_out = jax.block_until_ready(b_out)

    # Sanity check against a plain-JAX reference of the same forward pass.
    w_ref, b_ref = _reference(x, params)
    assert w_out.shape == (batch, n_dim) and b_out.shape == (batch,)
    assert jnp.allclose(w_out, w_ref, atol=1e-5)
    assert jnp.allclose(b_out, b_ref, atol=1e-5)

    print("KERNEL_OK")
</pallas_src>

<mosaic_0001>
module attributes {stable_mosaic.version = 11 : i64} {
  func.func @_net_kernel(%arg0: i32, %arg1: memref<8x2xf32, #tpu.memory_space<vmem>>, %arg2: memref<2x4xf32, #tpu.memory_space<vmem>>, %arg3: memref<1x4xf32, #tpu.memory_space<vmem>>, %arg4: memref<8x3xf32, #tpu.memory_space<vmem>>) attributes {dimension_semantics = [#tpu.dimension_semantics<parallel>], iteration_bounds = array<i64: 1>, scalar_prefetch = 0 : i64, scratch_operands = 0 : i64, tpu.core_type = #tpu.core_type<tc>, window_params = [{transform_indices = @transform_0, window_bounds = array<i64: 8, 2>}, {pipeline_mode = #tpu.pipeline_mode<synchronous>, transform_indices = @transform_1, window_bounds = array<i64: 2, 4>}, {pipeline_mode = #tpu.pipeline_mode<synchronous>, transform_indices = @transform_2, window_bounds = array<i64: 1, 4>}, {transform_indices = @transform_3, window_bounds = array<i64: 8, 3>}]} {
    %c0 = arith.constant 0 : index
    %c0_0 = arith.constant 0 : index
    %0 = vector.load %arg1[%c0, %c0_0] : memref<8x2xf32, #tpu.memory_space<vmem>>, vector<8x2xf32>
    %c0_1 = arith.constant 0 : index
    %c0_2 = arith.constant 0 : index
    %1 = vector.load %arg2[%c0_1, %c0_2] : memref<2x4xf32, #tpu.memory_space<vmem>>, vector<2x4xf32>
    %c0_3 = arith.constant 0 : index
    %c0_4 = arith.constant 0 : index
    %2 = vector.load %arg3[%c0_3, %c0_4] : memref<1x4xf32, #tpu.memory_space<vmem>>, vector<1x4xf32>
    %3 = vector.shape_cast %2 : vector<1x4xf32> to vector<1x4xf32>
    %4 = vector.broadcast %3 : vector<1x4xf32> to vector<8x4xf32>
    %5 = vector.extract_strided_slice %0 {offsets = [0, 0], sizes = [8, 1], strides = [1, 1]} : vector<8x2xf32> to vector<8x1xf32>
    %6 = vector.extract_strided_slice %1 {offsets = [0, 0], sizes = [1, 4], strides = [1, 1]} : vector<2x4xf32> to vector<1x4xf32>
    %7 = vector.broadcast %5 : vector<8x1xf32> to vector<8x4xf32>
    %8 = vector.broadcast %6 : vector<1x4xf32> to vector<8x4xf32>
    %9 = arith.mulf %7, %8 : vector<8x4xf32>
    %10 = arith.addf %4, %9 : vector<8x4xf32>
    %11 = vector.extract_strided_slice %0 {offsets = [0, 1], sizes = [8, 1], strides = [1, 1]} : vector<8x2xf32> to vector<8x1xf32>
    %12 = vector.extract_strided_slice %1 {offsets = [1, 0], sizes = [1, 4], strides = [1, 1]} : vector<2x4xf32> to vector<1x4xf32>
    %13 = vector.broadcast %11 : vector<8x1xf32> to vector<8x4xf32>
    %14 = vector.broadcast %12 : vector<1x4xf32> to vector<8x4xf32>
    %15 = arith.mulf %13, %14 : vector<8x4xf32>
    %16 = arith.addf %10, %15 : vector<8x4xf32>
    %17 = vector.extract_strided_slice %16 {offsets = [0, 0], sizes = [8, 2], strides = [1, 1]} : vector<8x4xf32> to vector<8x2xf32>
    %18 = vector.extract_strided_slice %16 {offsets = [0, 2], sizes = [8, 2], strides = [1, 1]} : vector<8x4xf32> to vector<8x2xf32>
    %19 = arith.mulf %18, %18 : vector<8x2xf32>
    %cst = arith.constant dense<0.000000e+00> : vector<8xf32>
    %20 = vector.multi_reduction <add>, %19, %cst [1] : vector<8x2xf32> to vector<8xf32>
    %21 = vector.shape_cast %20 : vector<8xf32> to vector<8x1xf32>
    %cst_5 = arith.constant 0.000000e+00 : f32
    %22 = vector.broadcast %cst_5 : f32 to vector<8x1xf32>
    %23 = arith.subf %22, %21 : vector<8x1xf32>
    %c0_6 = arith.constant 0 : index
    %c0_7 = arith.constant 0 : index
    %24 = vector.load %arg4[%c0_6, %c0_7] : memref<8x3xf32, #tpu.memory_space<vmem>>, vector<8x2xf32>
    tpu.vector_store %arg4[%c0_6, %c0_7], %17 {strides = array<i32>} : memref<8x3xf32, #tpu.memory_space<vmem>>, vector<8x2xf32>,
    %c0_8 = arith.constant 0 : index
    %c2 = arith.constant 2 : index
    %25 = vector.load %arg4[%c0_8, %c2] : memref<8x3xf32, #tpu.memory_space<vmem>>, vector<8x1xf32>
    tpu.vector_store %arg4[%c0_8, %c2], %23 {strides = array<i32>} : memref<8x3xf32, #tpu.memory_space<vmem>>, vector<8x1xf32>,
    return
  }
  func.func @transform_0(%arg0: i32) -> (i32, i32) {
    %c0_i32 = arith.constant 0 : i32
    %c0_i32_0 = arith.constant 0 : i32
    return %arg0, %c0_i32 : i32, i32
  }
  func.func @transform_1(%arg0: i32) -> (i32, i32) {
    %c0_i32 = arith.constant 0 : i32
    %c0_i32_0 = arith.constant 0 : i32
    %c0_i32_1 = arith.constant 0 : i32
    return %c0_i32, %c0_i32_0 : i32, i32
  }
  func.func @transform_2(%arg0: i32) -> (i32, i32) {
    %c0_i32 = arith.constant 0 : i32
    %c0_i32_0 = arith.constant 0 : i32
    %c0_i32_1 = arith.constant 0 : i32
    return %c0_i32, %c0_i32_0 : i32, i32
  }
  func.func @transform_3(%arg0: i32) -> (i32, i32) {
    %c0_i32 = arith.constant 0 : i32
    %c0_i32_0 = arith.constant 0 : i32
    return %arg0, %c0_i32 : i32, i32
  }
}

</mosaic_0001>

<llo_original>
// kernel: tpu_custom_call.1
$region0: #{tpu_custom_call.1}
  #allocation0 [shape = 'u32[]', space=smem, size = 0x4, offset = 0x4, fixed_abs, tag = 'smem constant byte address 0x4 - core index']
  #allocation1 [shape = 'u32[144,128]{1,0:T(1,128)}', space=vmem, size = 0x12000, scoped, tag = 'internal scratch']
  %s0 = inlined_call_operand.vmem [shape: f32[8,2], index: 0, kind: input, shape index: {}]
  %s1 = inlined_call_operand.vmem [shape: f32[2,4], index: 1, kind: input, shape index: {}]
  %s2 = inlined_call_operand.vmem [shape: f32[1,4], index: 2, kind: input, shape index: {}]
  %s3 = inlined_call_operand.vmem [shape: f32[8,3], index: 3, kind: output, shape index: {}]
  %s4 = sld [smem:[#allocation0]]
  $region22: #{tpu_custom_call.1} parent=0
    _
  %s6 = ssub.s32 1, %s4
  %s7 = scalar_select 0, %s6, %s4
  // Predicated region
  $region2: #{tpu_custom_call.1} parent=0 // pred_check
    _
  $region3: #{tpu_custom_call.1} parent=0 // pred_check_branch
    %9 = sbr.rel (0) target = $region5
  $region4: #{tpu_custom_call.1} parent=0 // pred_region
    _
  $region5: #{tpu_custom_call.1} parent=0 // pred_fallthru
    _
  // Predicated region
  $region6: #{tpu_custom_call.1} parent=0 // pred_check
    _
  $region7: #{tpu_custom_call.1} parent=0 // pred_check_branch
    %11 = sbr.rel (0) target = $region9
  $region8: #{tpu_custom_call.1} parent=0 // pred_region
    _
  $region9: #{tpu_custom_call.1} parent=0 // pred_fallthru
    _
  // Predicated region
  $region10: #{tpu_custom_call.1} parent=0 // pred_check
    _
  $region11: #{tpu_custom_call.1} parent=0 // pred_check_branch
    %13 = sbr.rel (0) target = $region13
  $region12: #{tpu_custom_call.1} parent=0 // pred_region
    _
  $region13: #{tpu_custom_call.1} parent=0 // pred_fallthru
    _
  %v14 = vld [vmem:[%s0] sm:$0xff]
  %v15 = vld [vmem:[%s1] sm:$0x3]
  %v16 = vld [vmem:[%s2] sm:$0x1]
  %v18 = vlaneseq
  %v19 = vshrl.u32 %v18, 7
  %v20 = vsub.s32 0, %v19
  %v21 = vrot.slane %v16, %v20
  %24 = vset.pattern.permute.xlu0 0
  %25 = vperm.xlu0 %24, %v14
  %v26 = vpop.permute.xlu0 %25
  %v28 = vlaneseq
  %v29 = vshrl.u32 %v28, 7
  %v30 = vsub.s32 0, %v29
  %v31 = vrot.slane %v15, %v30
  %v32 = vmul.f32 %v26, %v31
  %v33 = vadd.f32 %v21, %v32
  %34 = vset.pattern.permute.xlu0 1
  %35 = vperm.xlu0 %34, %v14
  %v36 = vpop.permute.xlu0 %35
  %v38 = vlaneseq
  %v39 = vshrl.u32 %v38, 7
  %v40 = vsub.s32 1, %v39
  %v41 = vrot.slane %v15, %v40
  %v42 = vmul.f32 %v36, %v41
  %v43 = vadd.f32 %v33, %v42
  %v44 = vmul.f32 %v43, %v43
  %46 = vrot.lane.b32.xlu0 %v44, 126
  %v47 = vpop.permute.xlu0 %46
  %vm49 = vcmask 15360
  %v50 = vsel %vm49, %v47, 0.0
  %51 = vadd.xlane.f32.xlu0 %v50
  %v52 = vpop.xlane.xlu0 %51
  %v53 = vsub.f32 0.0, %v52
  %54 = vst.msk [vmem:[%s3] sm:$0xff] %vm49, %v43
  %vm55 = vcmask 23568
  %56 = vst.msk [vmem:[%s3] sm:$0xff] %vm55, %v53
  // Predicated region
  $region14: #{tpu_custom_call.1} parent=0 // pred_check
    _
  $region15: #{tpu_custom_call.1} parent=0 // pred_check_branch
    %58 = sbr.rel (0) target = $region17
  $region16: #{tpu_custom_call.1} parent=0 // pred_region
    _
  $region17: #{tpu_custom_call.1} parent=0 // pred_fallthru
    _
  // Predicated region
  $region18: #{tpu_custom_call.1} parent=0 // pred_check
    _
  $region19: #{tpu_custom_call.1} parent=0 // pred_check_branch
    %60 = sbr.rel (0) target = $region21
  $region20: #{tpu_custom_call.1} parent=0 // pred_region
    _
  $region21: #{tpu_custom_call.1} parent=0 // pred_fallthru
    _

</llo_original>
